<compile_context>
chip_gen: v6e
topology: v6e:2x2x1
jax: 0.10.0
libtpu: 0.0.40
codegen_flags: <defaults>
</compile_context>

<pallas_src>
import jax
import jax.numpy as jnp
from jax.experimental import pallas as pl
from jax.experimental.pallas import tpu as pltpu

BN_EPS = 1e-5


def siamase_kernel(x_ref, w1_ref, vecs_ref, w2_ref, out_ref, acc_ref):
    """Grid over the F (reduction) axis of Linear1.

    x_ref:    (3B, TK) bf16  stacked [anchor; positive; negative] (flattened), K-tile
    w1_ref:   (TK, H)  bf16  Linear1 weight, K-tile
    vecs_ref: (4, H)   f32   rows: b1, gamma, beta, b2 (resident across grid)
    w2_ref:   (H, H)   bf16  Linear2 weight (resident across grid)
    out_ref:  (2, B)   f32   row 0 = ap distance, row 1 = an distance
    acc_ref:  (3B, H)  f32   Linear1 accumulator scratch
    """
    k = pl.program_id(0)

    @pl.when(k == 0)
    def _():
        acc_ref[...] = jnp.zeros_like(acc_ref)

    # Linear1 partial product — one MXU pass over the stacked 3B batch per K-tile.
    acc_ref[...] += jnp.dot(x_ref[...], w1_ref[...],
                            preferred_element_type=jnp.float32)

    @pl.when(k == pl.num_programs(0) - 1)
    def _():
        B = out_ref.shape[1]
        H = w2_ref.shape[1]

        vecs = vecs_ref[...]                      # (4, H) f32
        b1 = vecs[0:1, :]                         # (1, H)
        gamma = vecs[1:2, :].reshape(1, 1, H)     # (1, 1, H)
        beta = vecs[2:3, :].reshape(1, 1, H)      # (1, 1, H)
        b2 = vecs[3:4, :]                         # (1, H)

        # Bias + ReLU (all epilogue math stays f32; only MXU operands are bf16).
        h = jnp.maximum(acc_ref[...] + b1, 0.0)   # (3B, H) f32

        # BatchNorm1d, training mode, statistics PER BRANCH:
        # reshape (3B, H) -> (3, B, H) and reduce over the batch axis only.
        # Single pass: var = E[h^2] - E[h]^2 (biased, as in PyTorch).
        h3 = h.reshape(3, B, H)
        mean = jnp.mean(h3, axis=1, keepdims=True)            # (3, 1, H)
        mean_sq = jnp.mean(h3 * h3, axis=1, keepdims=True)    # (3, 1, H)
        var = jnp.maximum(mean_sq - mean * mean, 0.0)
        hn = (h3 - mean) * jax.lax.rsqrt(var + BN_EPS)
        hn = (hn * gamma + beta).reshape(3 * B, H)             # (3B, H) f32

        # Linear2 (+ bias) — second single MXU pass over the stacked batch.
        emb = jnp.dot(hn.astype(jnp.bfloat16), w2_ref[...],
                      preferred_element_type=jnp.float32) + b2  # (3B, H) f32

        a_emb = emb[0:B]
        p_emb = emb[B:2 * B]
        n_emb = emb[2 * B:3 * B]

        # DistanceLayer: max(|.|) over the embedding (lane) axis.
        out_ref[0] = jnp.max(jnp.abs(a_emb - p_emb), axis=1)    # (B,)
        out_ref[1] = jnp.max(jnp.abs(a_emb - n_emb), axis=1)    # (B,)


def prepare_params(params):
    """One-time parameter packing (hoisted out of the per-call path).

    params = (w1, b1, gamma, beta, w2, b2), shapes (F,H),(1,H),(1,H),(1,H),(H,H),(1,H).
    Returns (w1_bf16, vecs_f32(4,H), w2_bf16).
    """
    w1, b1, gamma, beta, w2, b2 = params
    vecs = jnp.concatenate([b1, gamma, beta, b2], axis=0).astype(jnp.float32)
    return (w1.astype(jnp.bfloat16), vecs, w2.astype(jnp.bfloat16))


@jax.jit
def siamase_forward(anchor, positive, negative, packed_params):
    """anchor/positive/negative: (B, C, H, W) float32 (NCHW).

    Returns (ap_distance, an_distance), each shape (B,), matching PyTorch.
    """
    w1_bf16, vecs, w2_bf16 = packed_params
    B = anchor.shape[0]
    F = w1_bf16.shape[0]
    H = w2_bf16.shape[1]

    a = anchor.reshape(B, -1)
    p = positive.reshape(B, -1)
    n = negative.reshape(B, -1)
    # Stack branches into one (3B, F) batch and cast to bf16 in the wrapper:
    # one input DMA at half the bytes, one MXU matmul per layer per K-tile.
    x = jnp.concatenate([a, p, n], axis=0).astype(jnp.bfloat16)

    # K tile: 128 at these toy sizes (grid of 2 exercises the accumulator path);
    # raise to 512 at the real F=2048 for fewer per-step overheads.
    tk = 128 if (F % 128 == 0 and F > 128) else F
    grid_k = F // tk

    cost = pl.CostEstimate(
        flops=2 * 3 * B * (F * H + H * H),
        transcendentals=3 * H,                       # per-branch rsqrt over channels
        bytes_accessed=(3 * B * F * 2 + F * H * 2 + H * H * 2 + 4 * H * 4
                        + 2 * B * 4),
    )

    out = pl.pallas_call(
        siamase_kernel,
        out_shape=jax.ShapeDtypeStruct((2, B), jnp.float32),
        grid_spec=pltpu.PrefetchScalarGridSpec(
            num_scalar_prefetch=0,
            grid=(grid_k,),
            in_specs=[
                pl.BlockSpec((3 * B, tk), lambda k: (0, k)),   # x K-tile
                pl.BlockSpec((tk, H), lambda k: (k, 0)),       # w1 K-tile
                pl.BlockSpec((4, H), lambda k: (0, 0)),        # b1/gamma/beta/b2
                pl.BlockSpec((H, H), lambda k: (0, 0)),        # w2 (resident)
            ],
            out_specs=pl.BlockSpec((2, B), lambda k: (0, 0)),
            scratch_shapes=[pltpu.VMEM((3 * B, H), jnp.float32)],
        ),
        compiler_params=pltpu.CompilerParams(
            dimension_semantics=("arbitrary",),
            vmem_limit_bytes=32 * 1024 * 1024,
        ),
        cost_estimate=cost,
    )(x, w1_bf16, vecs, w2_bf16)

    return out[0], out[1]


def init_params(key, in_features, out_features):
    """Deterministic init mimicking PyTorch nn.Linear default (U(-1/sqrt(fan_in), +))."""
    k1, k2, k3, k4 = jax.random.split(key, 4)
    lim1 = 1.0 / jnp.sqrt(in_features)
    lim2 = 1.0 / jnp.sqrt(out_features)
    w1 = jax.random.uniform(k1, (in_features, out_features), jnp.float32, -lim1, lim1)
    b1 = jax.random.uniform(k2, (1, out_features), jnp.float32, -lim1, lim1)
    gamma = jnp.ones((1, out_features), jnp.float32)
    beta = jnp.zeros((1, out_features), jnp.float32)
    w2 = jax.random.uniform(k3, (out_features, out_features), jnp.float32, -lim2, lim2)
    b2 = jax.random.uniform(k4, (1, out_features), jnp.float32, -lim2, lim2)
    return (w1, b1, gamma, beta, w2, b2)


if __name__ == "__main__":
    key = jax.random.PRNGKey(0)
    kx, ka, kp, kn = jax.random.split(key, 4)

    B, C, Hs, Ws = 8, 4, 8, 8          # NCHW inputs; B multiple of 8 keeps tiles aligned
    F_IN = C * Hs * Ws                 # 256 (stands in for 2048)
    F_OUT = 128                        # stands in for 512

    anchor = jax.random.normal(ka, (B, C, Hs, Ws), jnp.float32)
    positive = jax.random.normal(kp, (B, C, Hs, Ws), jnp.float32)
    negative = jax.random.normal(kn, (B, C, Hs, Ws), jnp.float32)

    params = init_params(kx, F_IN, F_OUT)
    packed = prepare_params(params)      # one-time bf16 cast + (4, H) vector pack

    ap_dist, an_dist = siamase_forward(anchor, positive, negative, packed)
    jax.block_until_ready((ap_dist, an_dist))

    assert ap_dist.shape == (B,) and an_dist.shape == (B,)
    assert bool(jnp.all(jnp.isfinite(ap_dist))) and bool(jnp.all(jnp.isfinite(an_dist)))
    assert bool(jnp.all(ap_dist >= 0.0)) and bool(jnp.all(an_dist >= 0.0))
    print("KERNEL_OK")
</pallas_src>

<mosaic_0001>
module attributes {stable_mosaic.version = 11 : i64} {
  func.func @siamase_kernel(%arg0: i32, %arg1: memref<24x128xbf16, #tpu.memory_space<vmem>>, %arg2: memref<128x128xbf16, #tpu.memory_space<vmem>>, %arg3: memref<4x128xf32, #tpu.memory_space<vmem>>, %arg4: memref<128x128xbf16, #tpu.memory_space<vmem>>, %arg5: memref<2x8xf32, #tpu.memory_space<vmem>>, %arg6: memref<24x128xf32, #tpu.memory_space<vmem>>) attributes {dimension_semantics = [#tpu.dimension_semantics<arbitrary>], iteration_bounds = array<i64: 2>, scalar_prefetch = 0 : i64, scratch_operands = 1 : i64, tpu.core_type = #tpu.core_type<tc>, window_params = [{transform_indices = @transform_0, window_bounds = array<i64: 24, 128>}, {transform_indices = @transform_1, window_bounds = array<i64: 128, 128>}, {pipeline_mode = #tpu.pipeline_mode<synchronous>, transform_indices = @transform_2, window_bounds = array<i64: 4, 128>}, {pipeline_mode = #tpu.pipeline_mode<synchronous>, transform_indices = @transform_3, window_bounds = array<i64: 128, 128>}, {pipeline_mode = #tpu.pipeline_mode<synchronous>, transform_indices = @transform_4, window_bounds = array<i64: 2, 8>}]} {
    %c0_i32 = arith.constant 0 : i32
    %0 = arith.cmpi eq, %arg0, %c0_i32 : i32
    %1 = arith.extui %0 : i1 to i32
    %c0_i32_0 = arith.constant 0 : i32
    %2 = arith.cmpi ne, %1, %c0_i32_0 : i32
    scf.if %2 {
      %cst_9 = arith.constant 0.000000e+00 : f32
      %12 = vector.broadcast %cst_9 : f32 to vector<24x128xf32>
      %c0_10 = arith.constant 0 : index
      %c0_11 = arith.constant 0 : index
      %13 = vector.load %arg6[%c0_10, %c0_11] : memref<24x128xf32, #tpu.memory_space<vmem>>, vector<24x128xf32>
      tpu.vector_store %arg6[%c0_10, %c0_11], %12 {strides = array<i32>} : memref<24x128xf32, #tpu.memory_space<vmem>>, vector<24x128xf32>,
    } else {
    }
    %c0 = arith.constant 0 : index
    %c0_1 = arith.constant 0 : index
    %3 = vector.load %arg6[%c0, %c0_1] : memref<24x128xf32, #tpu.memory_space<vmem>>, vector<24x128xf32>
    %c0_2 = arith.constant 0 : index
    %c0_3 = arith.constant 0 : index
    %4 = vector.load %arg1[%c0_2, %c0_3] : memref<24x128xbf16, #tpu.memory_space<vmem>>, vector<24x128xbf16>
    %c0_4 = arith.constant 0 : index
    %c0_5 = arith.constant 0 : index
    %5 = vector.load %arg2[%c0_4, %c0_5] : memref<128x128xbf16, #tpu.memory_space<vmem>>, vector<128x128xbf16>
    %cst = arith.constant dense<0.000000e+00> : vector<24x128xf32>
    %6 = tpu.matmul %4, %5, %cst {dimension_numbers = #tpu.dot_dimension_numbers<[1], [0], [0], [1], [0, 0, 1, 1], [], []>} : vector<24x128xbf16>, vector<128x128xbf16>, vector<24x128xf32> -> vector<24x128xf32>
    %7 = arith.addf %3, %6 : vector<24x128xf32>
    %c0_6 = arith.constant 0 : index
    %c0_7 = arith.constant 0 : index
    %8 = vector.load %arg6[%c0_6, %c0_7] : memref<24x128xf32, #tpu.memory_space<vmem>>, vector<24x128xf32>
    tpu.vector_store %arg6[%c0_6, %c0_7], %7 {strides = array<i32>} : memref<24x128xf32, #tpu.memory_space<vmem>>, vector<24x128xf32>,
    %c1_i32 = arith.constant 1 : i32
    %9 = arith.cmpi eq, %arg0, %c1_i32 : i32
    %10 = arith.extui %9 : i1 to i32
    %c0_i32_8 = arith.constant 0 : i32
    %11 = arith.cmpi ne, %10, %c0_i32_8 : i32
    scf.if %11 {
      %c0_9 = arith.constant 0 : index
      %c0_10 = arith.constant 0 : index
      %12 = vector.load %arg3[%c0_9, %c0_10] : memref<4x128xf32, #tpu.memory_space<vmem>>, vector<4x128xf32>
      %13 = vector.extract_strided_slice %12 {offsets = [0, 0], sizes = [1, 128], strides = [1, 1]} : vector<4x128xf32> to vector<1x128xf32>
      %14 = vector.extract_strided_slice %12 {offsets = [1, 0], sizes = [1, 128], strides = [1, 1]} : vector<4x128xf32> to vector<1x128xf32>
      %15 = vector.shape_cast %14 : vector<1x128xf32> to vector<1x1x128xf32>
      %16 = vector.extract_strided_slice %12 {offsets = [2, 0], sizes = [1, 128], strides = [1, 1]} : vector<4x128xf32> to vector<1x128xf32>
      %17 = vector.shape_cast %16 : vector<1x128xf32> to vector<1x1x128xf32>
      %18 = vector.extract_strided_slice %12 {offsets = [3, 0], sizes = [1, 128], strides = [1, 1]} : vector<4x128xf32> to vector<1x128xf32>
      %c0_11 = arith.constant 0 : index
      %c0_12 = arith.constant 0 : index
      %19 = vector.load %arg6[%c0_11, %c0_12] : memref<24x128xf32, #tpu.memory_space<vmem>>, vector<24x128xf32>
      %20 = vector.broadcast %13 : vector<1x128xf32> to vector<24x128xf32>
      %21 = arith.addf %19, %20 : vector<24x128xf32>
      %cst_13 = arith.constant 0.000000e+00 : f32
      %22 = vector.broadcast %cst_13 : f32 to vector<24x128xf32>
      %23 = arith.maximumf %21, %22 : vector<24x128xf32>
      %24 = vector.shape_cast %23 : vector<24x128xf32> to vector<3x8x128xf32>
      %cst_14 = arith.constant dense<0.000000e+00> : vector<3x128xf32>
      %25 = vector.multi_reduction <add>, %24, %cst_14 [1] : vector<3x8x128xf32> to vector<3x128xf32>
      %26 = vector.shape_cast %25 : vector<3x128xf32> to vector<3x1x128xf32>
      %cst_15 = arith.constant 8.000000e+00 : f32
      %27 = vector.broadcast %cst_15 : f32 to vector<3x1x128xf32>
      %28 = arith.divf %26, %27 : vector<3x1x128xf32>
      %29 = arith.mulf %24, %24 : vector<3x8x128xf32>
      %cst_16 = arith.constant dense<0.000000e+00> : vector<3x128xf32>
      %30 = vector.multi_reduction <add>, %29, %cst_16 [1] : vector<3x8x128xf32> to vector<3x128xf32>
      %31 = vector.shape_cast %30 : vector<3x128xf32> to vector<3x1x128xf32>
      %cst_17 = arith.constant 8.000000e+00 : f32
      %32 = vector.broadcast %cst_17 : f32 to vector<3x1x128xf32>
      %33 = arith.divf %31, %32 : vector<3x1x128xf32>
      %34 = arith.mulf %28, %28 : vector<3x1x128xf32>
      %35 = arith.subf %33, %34 : vector<3x1x128xf32>
      %cst_18 = arith.constant 0.000000e+00 : f32
      %36 = vector.broadcast %cst_18 : f32 to vector<3x1x128xf32>
      %37 = arith.maximumf %35, %36 : vector<3x1x128xf32>
      %38 = vector.broadcast %28 : vector<3x1x128xf32> to vector<3x8x128xf32>
      %39 = arith.subf %24, %38 : vector<3x8x128xf32>
      %cst_19 = arith.constant 9.99999974E-6 : f32
      %40 = vector.broadcast %cst_19 : f32 to vector<3x1x128xf32>
      %41 = arith.addf %37, %40 : vector<3x1x128xf32>
      %42 = math.rsqrt %41 : vector<3x1x128xf32>
      %43 = vector.broadcast %42 : vector<3x1x128xf32> to vector<3x8x128xf32>
      %44 = arith.mulf %39, %43 : vector<3x8x128xf32>
      %45 = vector.broadcast %15 : vector<1x1x128xf32> to vector<3x8x128xf32>
      %46 = arith.mulf %44, %45 : vector<3x8x128xf32>
      %47 = vector.broadcast %17 : vector<1x1x128xf32> to vector<3x8x128xf32>
      %48 = arith.addf %46, %47 : vector<3x8x128xf32>
      %49 = vector.shape_cast %48 : vector<3x8x128xf32> to vector<24x128xf32>
      %50 = arith.truncf %49 : vector<24x128xf32> to vector<24x128xbf16>
      %c0_20 = arith.constant 0 : index
      %c0_21 = arith.constant 0 : index
      %51 = vector.load %arg4[%c0_20, %c0_21] : memref<128x128xbf16, #tpu.memory_space<vmem>>, vector<128x128xbf16>
      %cst_22 = arith.constant dense<0.000000e+00> : vector<24x128xf32>
      %52 = tpu.matmul %50, %51, %cst_22 {dimension_numbers = #tpu.dot_dimension_numbers<[1], [0], [0], [1], [0, 0, 1, 1], [], []>} : vector<24x128xbf16>, vector<128x128xbf16>, vector<24x128xf32> -> vector<24x128xf32>
      %53 = vector.broadcast %18 : vector<1x128xf32> to vector<24x128xf32>
      %54 = arith.addf %52, %53 : vector<24x128xf32>
      %55 = vector.extract_strided_slice %54 {offsets = [0, 0], sizes = [8, 128], strides = [1, 1]} : vector<24x128xf32> to vector<8x128xf32>
      %56 = vector.extract_strided_slice %54 {offsets = [8, 0], sizes = [8, 128], strides = [1, 1]} : vector<24x128xf32> to vector<8x128xf32>
      %57 = vector.extract_strided_slice %54 {offsets = [16, 0], sizes = [8, 128], strides = [1, 1]} : vector<24x128xf32> to vector<8x128xf32>
      %58 = arith.subf %55, %56 : vector<8x128xf32>
      %59 = math.absf %58 : vector<8x128xf32>
      %cst_23 = arith.constant dense<0xFF800000> : vector<8xf32>
      %60 = vector.multi_reduction <maximumf>, %59, %cst_23 [1] : vector<8x128xf32> to vector<8xf32>
      %c0_24 = arith.constant 0 : index
      %c0_25 = arith.constant 0 : index
      %61 = vector.load %arg5[%c0_24, %c0_25] : memref<2x8xf32, #tpu.memory_space<vmem>>, vector<1x8xf32>
      %62 = vector.shape_cast %61 : vector<1x8xf32> to vector<8xf32>
      %63 = vector.shape_cast %60 : vector<8xf32> to vector<1x8xf32>
      tpu.vector_store %arg5[%c0_24, %c0_25], %63 {strides = array<i32>} : memref<2x8xf32, #tpu.memory_space<vmem>>, vector<1x8xf32>,
      %64 = arith.subf %55, %57 : vector<8x128xf32>
      %65 = math.absf %64 : vector<8x128xf32>
      %cst_26 = arith.constant dense<0xFF800000> : vector<8xf32>
      %66 = vector.multi_reduction <maximumf>, %65, %cst_26 [1] : vector<8x128xf32> to vector<8xf32>
      %c1 = arith.constant 1 : index
      %c0_27 = arith.constant 0 : index
      %67 = vector.load %arg5[%c1, %c0_27] : memref<2x8xf32, #tpu.memory_space<vmem>>, vector<1x8xf32>
      %68 = vector.shape_cast %67 : vector<1x8xf32> to vector<8xf32>
      %69 = vector.shape_cast %66 : vector<8xf32> to vector<1x8xf32>
      tpu.vector_store %arg5[%c1, %c0_27], %69 {strides = array<i32>} : memref<2x8xf32, #tpu.memory_space<vmem>>, vector<1x8xf32>,
    } else {
    }
    return
  }
  func.func @transform_0(%arg0: i32) -> (i32, i32) {
    %c0_i32 = arith.constant 0 : i32
    %c0_i32_0 = arith.constant 0 : i32
    return %c0_i32, %arg0 : i32, i32
  }
  func.func @transform_1(%arg0: i32) -> (i32, i32) {
    %c0_i32 = arith.constant 0 : i32
    %c0_i32_0 = arith.constant 0 : i32
    return %arg0, %c0_i32 : i32, i32
  }
  func.func @transform_2(%arg0: i32) -> (i32, i32) {
    %c0_i32 = arith.constant 0 : i32
    %c0_i32_0 = arith.constant 0 : i32
    %c0_i32_1 = arith.constant 0 : i32
    return %c0_i32, %c0_i32_0 : i32, i32
  }
  func.func @transform_3(%arg0: i32) -> (i32, i32) {
    %c0_i32 = arith.constant 0 : i32
    %c0_i32_0 = arith.constant 0 : i32
    %c0_i32_1 = arith.constant 0 : i32
    return %c0_i32, %c0_i32_0 : i32, i32
  }
  func.func @transform_4(%arg0: i32) -> (i32, i32) {
    %c0_i32 = arith.constant 0 : i32
    %c0_i32_0 = arith.constant 0 : i32
    %c0_i32_1 = arith.constant 0 : i32
    return %c0_i32, %c0_i32_0 : i32, i32
  }
}

</mosaic_0001>

<llo_original>
// kernel: siamase_forward.1
$region0: #{siamase_forward.1}
  #allocation0 [shape = 'u32[]', space=smem, size = 0x4, offset = 0x4, fixed_abs, tag = 'smem constant byte address 0x4 - core index']
  #allocation1 [shape = 'u32[144,128]{1,0:T(1,128)}', space=vmem, size = 0x12000, scoped, tag = 'internal scratch']
  #allocation2 [shape = 'f32[24,128]{1,0:T(8,128)}', space=vmem, size = 0x3000, scoped, tag = 'scratch operand']
  %s0 = inlined_call_operand.vmem [shape: bf16[24,256], index: 0, kind: input, shape index: {}]
  %s1 = inlined_call_operand.vmem [shape: bf16[256,128], index: 1, kind: input, shape index: {}]
  %s2 = inlined_call_operand.vmem [shape: f32[4,128], index: 2, kind: input, shape index: {}]
  %s3 = inlined_call_operand.vmem [shape: bf16[128,128], index: 3, kind: input, shape index: {}]
  %s4 = inlined_call_operand.vmem [shape: f32[2,8], index: 4, kind: output, shape index: {}]
  %s5 = sld [smem:[#allocation0]]
  $region98: #{siamase_forward.1} parent=0
    _
  %s7 = ssub.s32 1, %s5
  %s8 = scalar_select 0, %s7, %s5
  $region1: #{siamase_forward.1} parent=0
    #allocation3 [shape = 'u8[12288]{0}', space=vmem, size = 0x3000, scoped, tag = 'input window, operand 0']
    loop: start=0, step=1, limit=4
    $region2: #{siamase_forward.1} parent=1 // loop_pre_header
      _
    $region3: #{siamase_forward.1} parent=1 // loop_header
      %s10 = sphi 0, %s14
      %p11 = scmp.ge.s32.totalorder %s10, 4
      %s20 = sphi 0, %s22
      %s23 = sphi 0, %s20
      %s24 = sphi 0, %s23
      %s40 = sphi 0, %s24
      %s46 = sphi 0, %s48
      %s49 = sphi 0, %s46
      %s50 = sphi 0, %s49
      %s66 = sphi 0, %s50
      %s70 = sphi 0, %s70
      %s72 = sphi 0, %s70
      %s73 = sphi 0, %s72
      %s87 = sphi 0, %s73
      %s91 = sphi 0, %s91
      %s93 = sphi 0, %s91
      %s94 = sphi 0, %s93
      %s108 = sphi 0, %s94
      %s112 = sphi 0, %s112
      %s114 = sphi 0, %s112
      %s115 = sphi 0, %s114
      %s129 = sphi 0, %s115
    $region4: #{siamase_forward.1} parent=1 // loop_header_branch
      %13 = sbr.rel (%p11) target = $region8
    $region5: #{siamase_forward.1} parent=1 // loop_body
      %s15 = ssub.s32 %s10, 1
      %s16 = ssub.s32 %s10, 2
      %s17 = sadd.s32 %s10, 1
      %s18 = ssub.s32 %s10, %s17
      %p19 = scmp.eq.s32.totalorder %s18, 0
      %s21 = sadd.s32 %s20, 1
      %s22 = scalar_select %p19, %s20, %s21
      %p25 = pneg %p19
      %p26 = scmp.eq.s32.totalorder %s10, 1
      %p27 = por %p25, %p26
      %p28 = scmp.ne.s32.totalorder %s20, %s23
      %p29 = scmp.eq.s32.totalorder %s10, 0
      %p30 = por %p28, %p29
      %p31 = scmp.ne.s32.totalorder %s20, %s23
      %p32 = scmp.eq.s32.totalorder %s15, 1
      %p33 = por %p31, %p32
      %p34 = scmp.ne.s32.totalorder %s23, %s24
      %p35 = scmp.eq.s32.totalorder %s15, 0
      %p36 = por %p34, %p35
      %p37 = scmp.ne.s32.totalorder %s23, %s24
      %p38 = scmp.eq.s32.totalorder %s16, 1
      %p39 = por %p37, %p38
      %p41 = scmp.ne.s32.totalorder %s24, %s40
      %p42 = scmp.eq.s32.totalorder %s16, 0
      %p43 = por %p41, %p42
      %s44 = ssub.s32 %s10, %s17
      %p45 = scmp.eq.s32.totalorder %s44, 0
      %s47 = sadd.s32 %s46, 1
      %s48 = scalar_select %p45, %s46, %s47
      %p51 = pneg %p45
      %p52 = scmp.eq.s32.totalorder %s10, 1
      %p53 = por %p51, %p52
      %p54 = scmp.ne.s32.totalorder %s46, %s49
      %p55 = scmp.eq.s32.totalorder %s10, 0
      %p56 = por %p54, %p55
      %p57 = scmp.ne.s32.totalorder %s46, %s49
      %p58 = scmp.eq.s32.totalorder %s15, 1
      %p59 = por %p57, %p58
      %p60 = scmp.ne.s32.totalorder %s49, %s50
      %p61 = scmp.eq.s32.totalorder %s15, 0
      %p62 = por %p60, %p61
      %p63 = scmp.ne.s32.totalorder %s49, %s50
      %p64 = scmp.eq.s32.totalorder %s16, 1
      %p65 = por %p63, %p64
      %p67 = scmp.ne.s32.totalorder %s50, %s66
      %p68 = scmp.eq.s32.totalorder %s16, 0
      %p69 = por %p67, %p68
      %s71 = sadd.s32 %s70, 1
      %p74 = scmp.eq.s32.totalorder %s10, 1
      %p75 = scmp.ne.s32.totalorder %s70, %s72
      %p76 = scmp.eq.s32.totalorder %s10, 0
      %p77 = por %p75, %p76
      %p78 = scmp.ne.s32.totalorder %s70, %s72
      %p79 = scmp.eq.s32.totalorder %s15, 1
      %p80 = por %p78, %p79
      %p81 = scmp.ne.s32.totalorder %s72, %s73
      %p82 = scmp.eq.s32.totalorder %s15, 0
      %p83 = por %p81, %p82
      %p84 = scmp.ne.s32.totalorder %s72, %s73
      %p85 = scmp.eq.s32.totalorder %s16, 1
      %p86 = por %p84, %p85
      %p88 = scmp.ne.s32.totalorder %s73, %s87
      %p89 = scmp.eq.s32.totalorder %s16, 0
      %p90 = por %p88, %p89
      %s92 = sadd.s32 %s91, 1
      %p95 = scmp.eq.s32.totalorder %s10, 1
      %p96 = scmp.ne.s32.totalorder %s91, %s93
      %p97 = scmp.eq.s32.totalorder %s10, 0
      %p98 = por %p96, %p97
      %p99 = scmp.ne.s32.totalorder %s91, %s93
      %p100 = scmp.eq.s32.totalorder %s15, 1
      %p101 = por %p99, %p100
      %p102 = scmp.ne.s32.totalorder %s93, %s94
      %p103 = scmp.eq.s32.totalorder %s15, 0
      %p104 = por %p102, %p103
      %p105 = scmp.ne.s32.totalorder %s93, %s94
      %p106 = scmp.eq.s32.totalorder %s16, 1
      %p107 = por %p105, %p106
      %p109 = scmp.ne.s32.totalorder %s94, %s108
      %p110 = scmp.eq.s32.totalorder %s16, 0
      %p111 = por %p109, %p110
      %s113 = sadd.s32 %s112, 1
      %p116 = scmp.eq.s32.totalorder %s10, 1
      %p117 = scmp.ne.s32.totalorder %s112, %s114
      %p118 = scmp.eq.s32.totalorder %s10, 0
      %p119 = por %p117, %p118
      %p120 = scmp.ne.s32.totalorder %s112, %s114
      %p121 = scmp.eq.s32.totalorder %s15, 1
      %p122 = por %p120, %p121
      %p123 = scmp.ne.s32.totalorder %s114, %s115
      %p124 = scmp.eq.s32.totalorder %s15, 0
      %p125 = por %p123, %p124
      %p126 = scmp.ne.s32.totalorder %s114, %s115
      %p127 = scmp.eq.s32.totalorder %s16, 1
      %p128 = por %p126, %p127
      %p130 = scmp.ne.s32.totalorder %s115, %s129
      %p131 = scmp.eq.s32.totalorder %s16, 0
      %p132 = por %p130, %p131
      %p133 = scmp.le.s32.totalorder 1, %s10
      %p134 = scmp.lt.s32.totalorder %s10, 3
      %p135 = pnand %p133, %p134
      %p136 = pneg %p135
      // Predicated region
      $region9: #{siamase_forward.1} parent=5 // pred_check
        _
      $region10: #{siamase_forward.1} parent=5 // pred_check_branch
        %138 = sbr.rel (%p135) target = $region12
      $region11: #{siamase_forward.1} parent=5 // pred_region
        %s139 = ssub.s32 %s10, 1
        // Predicated region
        $region13: #{siamase_forward.1} parent=11 // pred_check
          %p140 = pneg %p83
        $region14: #{siamase_forward.1} parent=11 // pred_check_branch
          %142 = sbr.rel (%p140) target = $region16
        $region15: #{siamase_forward.1} parent=11 // pred_region
          _
        $region16: #{siamase_forward.1} parent=11 // pred_fallthru
          _
        // Predicated region
        $region17: #{siamase_forward.1} parent=11 // pred_check
          %p143 = pneg %p104
        $region18: #{siamase_forward.1} parent=11 // pred_check_branch
          %145 = sbr.rel (%p143) target = $region20
        $region19: #{siamase_forward.1} parent=11 // pred_region
          _
        $region20: #{siamase_forward.1} parent=11 // pred_fallthru
          _
      $region12: #{siamase_forward.1} parent=5 // pred_fallthru
        _
      %p146 = scmp.lt.s32.totalorder %s10, 2
      // Predicated region
      $region21: #{siamase_forward.1} parent=5 // pred_check
        %p147 = pneg %p146
      $region22: #{siamase_forward.1} parent=5 // pred_check_branch
        %149 = sbr.rel (%p147) target = $region24
      $region23: #{siamase_forward.1} parent=5 // pred_region
        // Predicated region
        $region25: #{siamase_forward.1} parent=23 // pred_check
          %p150 = pneg %p30
        $region26: #{siamase_forward.1} parent=23 // pred_check_branch
          %152 = sbr.rel (%p150) target = $region28
        $region27: #{siamase_forward.1} parent=23 // pred_region
          %s153 = sand.u32 %s20, 1
          %s154 = sand.u32 %s20, 1
          %s155 = smul.addr %s154, 12
          %s156 = scalar_lea.vmem [#allocation3], %s155
          %s157 = smul.addr %s10, 4
          %s158 = scalar_lea.vmem %s0, %s157
          // Predicated region
          $region29: #{siamase_forward.1} parent=27 // pred_check
            _
          $region30: #{siamase_forward.1} parent=27 // pred_check_branch
            %160 = sbr.rel (0) target = $region32
          $region31: #{siamase_forward.1} parent=27 // pred_region
            // Predicated region
            $region33: #{siamase_forward.1} parent=31 // pred_check
              _
            $region34: #{siamase_forward.1} parent=31 // pred_check_branch
              %162 = sbr.rel target = $region36
            $region35: #{siamase_forward.1} parent=31 // pred_region
              // Predicated region
              $region48: #{siamase_forward.1} parent=35 // pred_check
                _
              $region49: #{siamase_forward.1} parent=35 // pred_check_branch
                %182 = sbr.rel (0) target = $region51
              $region50: #{siamase_forward.1} parent=35 // pred_region
                loop: start=0, step=1, limit=1
                $region52: #{siamase_forward.1} parent=50 // loop_pre_header
                  _
                $region53: #{siamase_forward.1} parent=50 // loop_header
                  %s184 = sphi 0, %s188
                  %p185 = scmp.ge.s32.totalorder %s184, 1
                  %s189 = sphi %s158, %s158
                  %s190 = sphi %s156, %s156
                $region54: #{siamase_forward.1} parent=50 // loop_header_branch
                  %187 = sbr.rel (%p185) target = $region58
                $region55: #{siamase_forward.1} parent=50 // loop_body
                  _
                $region56: #{siamase_forward.1} parent=50 // loop_footer
                  %s188 = sadd.s32 1, %s184
                $region57: #{siamase_forward.1} parent=50 // loop_footer_branch
                  %183 = sbr.rel target = $region53
                $region58: #{siamase_forward.1} parent=50 // loop_exit
                  _
                %s192 = ssub.s32 16, 1
                loop: start=0, step=1, limit=1
                $region59: #{siamase_forward.1} parent=50 // loop_pre_header
                  _
                $region60: #{siamase_forward.1} parent=50 // loop_header
                  %s194 = sphi 0, %s198
                  %p195 = scmp.ge.s32.totalorder %s194, 1
                  %s199 = sphi %s158, %s158
                  %s200 = sphi %s156, %s156
                $region61: #{siamase_forward.1} parent=50 // loop_header_branch
                  %197 = sbr.rel (%p195) target = $region65
                $region62: #{siamase_forward.1} parent=50 // loop_body
                  %v201 = vld [vmem:[%s199] sm:%s192]
                  %202 = vst [vmem:[%s200] sm:%s192] %v201
                  %v203 = vld [vmem:[%s199 + $0x8] sm:%s192]
                  %204 = vst [vmem:[%s200 + $0x4] sm:%s192] %v203
                  %v205 = vld [vmem:[%s199 + $0x10] sm:%s192]
                  %206 = vst [vmem:[%s200 + $0x8] sm:%s192] %v205
                $region63: #{siamase_forward.1} parent=50 // loop_footer
                  %s198 = sadd.s32 1, %s194
                $region64: #{siamase_forward.1} parent=50 // loop_footer_branch
                  %193 = sbr.rel target = $region60
                $region65: #{siamase_forward.1} parent=50 // loop_exit
                  _
              $region51: #{siamase_forward.1} parent=35 // pred_fallthru
                _
            $region36: #{siamase_forward.1} parent=31 // pred_fallthru
              _
            // Predicated region
            $region37: #{siamase_forward.1} parent=31 // pred_check
              _
            $region38: #{siamase_forward.1} parent=31 // pred_check_branch
              %164 = sbr.rel (0) target = $region40
            $region39: #{siamase_forward.1} parent=31 // pred_region
              %s166 = ssub.s32 16, 1
              loop: start=0, step=1, limit=1
              $region41: #{siamase_forward.1} parent=39 // loop_pre_header
                _
              $region42: #{siamase_forward.1} parent=39 // loop_header
                %s168 = sphi 0, %s172
                %p169 = scmp.ge.s32.totalorder %s168, 1
                %s173 = sphi %s158, %s158
                %s174 = sphi %s156, %s156
              $region43: #{siamase_forward.1} parent=39 // loop_header_branch
                %171 = sbr.rel (%p169) target = $region47
              $region44: #{siamase_forward.1} parent=39 // loop_body
                %v175 = vld [vmem:[%s173] sm:%s166]
                %176 = vst [vmem:[%s174] sm:%s166] %v175
                %v177 = vld [vmem:[%s173 + $0x8] sm:%s166]
                %178 = vst [vmem:[%s174 + $0x4] sm:%s166] %v177
                %v179 = vld [vmem:[%s173 + $0x10] sm:%s166]
                %180 = vst [vmem:[%s174 + $0x8] sm:%s166] %v179
              $region45: #{siamase_forward.1} parent=39 // loop_footer
                %s172 = sadd.s32 1, %s168
              $region46: #{siamase_forward.1} parent=39 // loop_footer_branch
                %167 = sbr.rel target = $region42
              $region47: #{siamase_forward.1} parent=39 // loop_exit
                _
            $region40: #{siamase_forward.1} parent=31 // pred_fallthru
              _
          $region32: #{siamase_forward.1} parent=27 // pred_fallthru
            _
          %207 = vnop
        $region28: #{siamase_forward.1} parent=23 // pred_fallthru
          _
        // Predicated region
        $region66: #{siamase_forward.1} parent=23 // pred_check
          %p208 = pneg %p56
        $region67: #{siamase_forward.1} parent=23 // pred_check_branch
          %210 = sbr.rel (%p208) target = $region69
        $region68: #{siamase_forward.1} parent=23 // pred_region
          %s211 = smul.u32 16, %s10
          %p212 = scmp.lt.s32.totalorder %s211, 31
          %s213 = scalar_select %p212, %s211, 31
          %s214 = smul.addr %s213, 4
          %s215 = scalar_lea.vmem %s1, %s214
          %s216 = smul.u32 16, %s10
        $region69: #{siamase_forward.1} parent=23 // pred_fallthru
          _
      $region24: #{siamase_forward.1} parent=5 // pred_fallthru
        _
      %p217 = scmp.le.s32.totalorder 1, %s10
      %p218 = scmp.lt.s32.totalorder %s10, 3
      %p219 = pnand %p217, %p218
      %p220 = pneg %p219
      // Predicated region
      $region70: #{siamase_forward.1} parent=5 // pred_check
        _
      $region71: #{siamase_forward.1} parent=5 // pred_check_branch
        %222 = sbr.rel (%p219) target = $region73
      $region72: #{siamase_forward.1} parent=5 // pred_region
        %s223 = ssub.s32 %s10, 1
        %s224 = sand.u32 %s23, 1
        %s225 = sand.u32 %s23, 1
        %s226 = smul.addr %s225, 12
        %s227 = scalar_lea.vmem [#allocation3], %s226
        // Predicated region
        $region74: #{siamase_forward.1} parent=72 // pred_check
          %p228 = pneg %p36
        $region75: #{siamase_forward.1} parent=72 // pred_check_branch
          %230 = sbr.rel (%p228) target = $region77
        $region76: #{siamase_forward.1} parent=72 // pred_region
          _
        $region77: #{siamase_forward.1} parent=72 // pred_fallthru
          _
        %s231 = sand.u32 %s23, 1
        %s232 = sand.u32 %s23, 1
        %s233 = smul.addr %s232, 12
        %s234 = scalar_lea.vmem [#allocation3], %s233
        %p235 = pneg %p36
        %p236 = pneg %p33
        %s237 = smul.u32 16, %s15
        %p238 = scmp.lt.s32.totalorder %s237, 31
        %s239 = scalar_select %p238, %s237, 31
        %s240 = smul.addr %s239, 4
        %s241 = scalar_lea.vmem %s1, %s240
        %p242 = pneg %p62
        %p243 = pneg %p59
        %p244 = pneg %p83
        %p245 = pneg %p80
        %p246 = pneg %p104
        %p247 = pneg %p101
        %p248 = pneg %p125
        %p249 = pneg %p122
        %s250 = smul.u32 16, %s15
        %p251 = scmp.lt.s32.totalorder %s250, 31
        %s252 = scalar_select %p251, %s250, 31
        %s253 = smul.addr %s252, 4
        %s254 = scalar_lea.vmem %s1, %s253
        %s255 = smul.u32 16, %s15
        %p257 = scmp.eq.s32.totalorder %s15, 0
        // Predicated region
        $region78: #{siamase_forward.1} parent=72 // pred_check
          %p258 = pneg %p257
        $region79: #{siamase_forward.1} parent=72 // pred_check_branch
          %260 = sbr.rel (%p258) target = $region81
        $region80: #{siamase_forward.1} parent=72 // pred_region
          %261 = vst [vmem:[#allocation2] sm:$0xff] 0.0
          %262 = vst [vmem:[#allocation2 + $0x8] sm:$0xff] 0.0
          %263 = vst [vmem:[#allocation2 + $0x10] sm:$0xff] 0.0
        $region81: #{siamase_forward.1} parent=72 // pred_fallthru
          _
        %v264 = vld [vmem:[#allocation2] sm:$0xff]
        %v265 = vld [vmem:[#allocation2 + $0x8] sm:$0xff]
        %v266 = vld [vmem:[#allocation2 + $0x10] sm:$0xff]
        %v267 = vld [vmem:[%s227] sm:$0xf]
        %v268 = vld [vmem:[%s227 + $0x4] sm:$0xf]
        %v269 = vld [vmem:[%s227 + $0x8] sm:$0xf]
        %v270 = vld [vmem:[%s254] sm:$0xf]
        %v271 = vld [vmem:[%s254 + $0x4] sm:$0xf]
        %v272 = vld [vmem:[%s254 + $0x8] sm:$0xf]
        %v273 = vld [vmem:[%s254 + $0xc] sm:$0xf]
        %v274 = vld [vmem:[%s254 + $0x10] sm:$0xf]
        %v275 = vld [vmem:[%s254 + $0x14] sm:$0xf]
        %v276 = vld [vmem:[%s254 + $0x18] sm:$0xf]
        %v277 = vld [vmem:[%s254 + $0x1c] sm:$0xf]
        %v278 = vld [vmem:[%s254 + $0x20] sm:$0xf]
        %v279 = vld [vmem:[%s254 + $0x24] sm:$0xf]
        %v280 = vld [vmem:[%s254 + $0x28] sm:$0xf]
        %v281 = vld [vmem:[%s254 + $0x2c] sm:$0xf]
        %v282 = vld [vmem:[%s254 + $0x30] sm:$0xf]
        %v283 = vld [vmem:[%s254 + $0x34] sm:$0xf]
        %v284 = vld [vmem:[%s254 + $0x38] sm:$0xf]
        %v285 = vld [vmem:[%s254 + $0x3c] sm:$0xf]
        %v289 = vunpack.c.l.b16 %v267
        %v290 = vunpack.c.l.b16 %v268
        %v291 = vunpack.c.l.b16 %v269
        %v292 = vpack.c.b16 %v290, %v289
        %v293 = vpack.c.b16 %v291, %v291
        %v312 = vunpack.c.l.b16 %v270
        %v313 = vunpack.c.l.b16 %v271
        %v314 = vunpack.c.l.b16 %v272
        %v315 = vunpack.c.l.b16 %v273
        %v316 = vunpack.c.l.b16 %v274
        %v317 = vunpack.c.l.b16 %v275
        %v318 = vunpack.c.l.b16 %v276
        %v319 = vunpack.c.l.b16 %v277
        %v320 = vunpack.c.l.b16 %v278
        %v321 = vunpack.c.l.b16 %v279
        %v322 = vunpack.c.l.b16 %v280
        %v323 = vunpack.c.l.b16 %v281
        %v324 = vunpack.c.l.b16 %v282
        %v325 = vunpack.c.l.b16 %v283
        %v326 = vunpack.c.l.b16 %v284
        %v327 = vunpack.c.l.b16 %v285
        %v328 = vpack.c.b16 %v313, %v312
        %v329 = vpack.c.b16 %v315, %v314
        %v330 = vpack.c.b16 %v317, %v316
        %v331 = vpack.c.b16 %v319, %v318
        %v332 = vpack.c.b16 %v321, %v320
        %v333 = vpack.c.b16 %v323, %v322
        %v334 = vpack.c.b16 %v325, %v324
        %v335 = vpack.c.b16 %v327, %v326
        %344 = vmatprep.subr.bf16.mxu0 0
        %345 = vmatpush1.bf16.msra.mxu0 %v335
        %346 = vmatprep.subr.bf16.mxu0 0
        %347 = vmatpush1.bf16.msra.mxu0 %v334
        %348 = vmatprep.subr.bf16.mxu0 0
        %349 = vmatpush1.bf16.msra.mxu0 %v333
        %350 = vmatprep.subr.bf16.mxu0 0
        %351 = vmatpush1.bf16.msra.mxu0 %v332
        %352 = vmatprep.subr.bf16.mxu0 0
        %353 = vmatpush1.bf16.msra.mxu0 %v331
        %354 = vmatprep.subr.bf16.mxu0 0
        %355 = vmatpush1.bf16.msra.mxu0 %v330
        %356 = vmatprep.subr.bf16.mxu0 0
        %357 = vmatpush1.bf16.msra.mxu0 %v329
        %358 = vmatprep.subr.bf16.mxu0 0
        %359 = vmatpush1.bf16.msra.mxu0 %v328
        %360 = vmatprep.subr.bf16.mxu0 0
        %361 = vmatpush2.bf16.msra.mxu0 0
        %362 = vmatprep.subr.bf16.mxu0 0
        %363 = vmatpush2.bf16.msra.mxu0 0
        %364 = vmatprep.subr.bf16.mxu0 0
        %365 = vmatpush2.bf16.msra.mxu0 0
        %366 = vmatprep.subr.bf16.mxu0 0
        %367 = vmatpush2.bf16.msra.mxu0 0
        %368 = vmatprep.subr.bf16.mxu0 0
        %369 = vmatpush2.bf16.msra.mxu0 0
        %370 = vmatprep.subr.bf16.mxu0 0
        %371 = vmatpush2.bf16.msra.mxu0 0
        %372 = vmatprep.subr.bf16.mxu0 0
        %373 = vmatpush2.bf16.msra.mxu0 0
        %374 = vmatprep.subr.bf16.mxu0 0
        %375 = vmatpush2.bf16.msra.mxu0 0
        %376 = vmatprep.mubr.bf16.mxu0 0
        %377 = vmatmul.mubr.bf16.gmra.mxu0 %v292
        %v378 = vpop.f32.mrf.mxu0
        %v379 = vadd.f32 0.0, %v378
        %v380 = vpop.f32.mrf.mxu0
        %v381 = vpop.f32.mrf.mxu0
        %v382 = vadd.f32 0.0, %v381
        %v383 = vpop.f32.mrf.mxu0
        %384 = vmatprep.mubr.bf16.mxu0 0
        %385 = vmatmul.mubr.bf16.gmra.mxu0 %v293
        %v386 = vpop.f32.mrf.mxu0
        %v387 = vadd.f32 0.0, %v386
        %v388 = vpop.f32.mrf.mxu0
        %v389 = vpop.f32.mrf.mxu0
        %v390 = vpop.f32.mrf.mxu0
        %391 = vdwg.mxu0
        %v392 = vadd.f32 %v264, %v379
        %v393 = vadd.f32 %v265, %v382
        %v394 = vadd.f32 %v266, %v387
        %395 = vst [vmem:[#allocation2] sm:$0xff] %v392
        %396 = vst [vmem:[#allocation2 + $0x8] sm:$0xff] %v393
        %397 = vst [vmem:[#allocation2 + $0x10] sm:$0xff] %v394
        %p398 = scmp.eq.s32.totalorder %s15, 1
        // Predicated region
        $region82: #{siamase_forward.1} parent=72 // pred_check
          %p399 = pneg %p398
        $region83: #{siamase_forward.1} parent=72 // pred_check_branch
          %401 = sbr.rel (%p399) target = $region85
        $region84: #{siamase_forward.1} parent=72 // pred_region
          %v402 = vld [vmem:[%s2] sm:$0xf]
          %v403 = vld [vmem:[#allocation2] sm:$0xff]
          %v404 = vld [vmem:[#allocation2 + $0x8] sm:$0xff]
          %v405 = vld [vmem:[#allocation2 + $0x10] sm:$0xff]
          %v406 = vlaneseq
          %v407 = vshrl.u32 %v406, 7
          %v408 = vsub.s32 0, %v407
          %v409 = vrot.slane %v402, %v408
          %v410 = vadd.f32 %v403, %v409
          %v411 = vadd.f32 %v404, %v409
          %v412 = vadd.f32 %v405, %v409
          %v413 = vmax.f32 %v410, 0.0
          %v414 = vmax.f32 %v411, 0.0
          %v415 = vmax.f32 %v412, 0.0
          %v416 = vrot.slane %v413, 4
          %v417 = vadd.f32 %v413, %v416
          %v418 = vrot.slane %v417, 2
          %v419 = vadd.f32 %v417, %v418
          %v420 = vrot.slane %v419, 1
          %v421 = vadd.f32 %v419, %v420
          %v422 = vrot.slane %v414, 4
          %v423 = vadd.f32 %v414, %v422
          %v424 = vrot.slane %v423, 2
          %v425 = vadd.f32 %v423, %v424
          %v426 = vrot.slane %v425, 1
          %v427 = vadd.f32 %v425, %v426
          %v428 = vrot.slane %v415, 4
          %v429 = vadd.f32 %v415, %v428
          %v430 = vrot.slane %v429, 2
          %v431 = vadd.f32 %v429, %v430
          %v432 = vrot.slane %v431, 1
          %v433 = vadd.f32 %v431, %v432
          %v434 = vrcp.pop 8.0
          %v435 = vmul.f32 %v421, %v434
          %v436 = vmul.f32 %v427, %v434
          %v437 = vmul.f32 %v433, %v434
          %v438 = vmul.f32 %v413, %v413
          %v439 = vmul.f32 %v414, %v414
          %v440 = vmul.f32 %v415, %v415
          %v441 = vrot.slane %v438, 4
          %v442 = vadd.f32 %v438, %v441
          %v443 = vrot.slane %v442, 2
          %v444 = vadd.f32 %v442, %v443
          %v445 = vrot.slane %v444, 1
          %v446 = vadd.f32 %v444, %v445
          %v447 = vrot.slane %v439, 4
          %v448 = vadd.f32 %v439, %v447
          %v449 = vrot.slane %v448, 2
          %v450 = vadd.f32 %v448, %v449
          %v451 = vrot.slane %v450, 1
          %v452 = vadd.f32 %v450, %v451
          %v453 = vrot.slane %v440, 4
          %v454 = vadd.f32 %v440, %v453
          %v455 = vrot.slane %v454, 2
          %v456 = vadd.f32 %v454, %v455
          %v457 = vrot.slane %v456, 1
          %v458 = vadd.f32 %v456, %v457
          %v459 = vmul.f32 %v446, %v434
          %v460 = vmul.f32 %v452, %v434
          %v461 = vmul.f32 %v458, %v434
          %v462 = vmul.f32 %v435, %v435
          %v463 = vmul.f32 %v436, %v436
          %v464 = vmul.f32 %v437, %v437
          %v465 = vsub.f32 %v459, %v462
          %v466 = vsub.f32 %v460, %v463
          %v467 = vsub.f32 %v461, %v464
          %v468 = vmax.f32 %v465, 0.0
          %v469 = vmax.f32 %v466, 0.0
          %v470 = vmax.f32 %v467, 0.0
          %v471 = vsub.f32 %v413, %v435
          %v472 = vsub.f32 %v414, %v436
          %v473 = vsub.f32 %v415, %v437
          %v474 = vadd.f32 %v468, 1e-05
          %v475 = vadd.f32 %v469, 1e-05
          %v476 = vadd.f32 %v470, 1e-05
          %v477 = vrsqrt.pop %v474
          %v478 = vrsqrt.pop %v475
          %v479 = vrsqrt.pop %v476
          %v480 = vmul.f32 %v471, %v477
          %v481 = vmul.f32 %v472, %v478
          %v482 = vmul.f32 %v473, %v479
          %v483 = vlaneseq
          %v484 = vshrl.u32 %v483, 7
          %v485 = vsub.s32 1, %v484
          %v486 = vrot.slane %v402, %v485
          %v487 = vmul.f32 %v480, %v486
          %v488 = vmul.f32 %v481, %v486
          %v489 = vmul.f32 %v482, %v486
          %v490 = vlaneseq
          %v491 = vshrl.u32 %v490, 7
          %v492 = vsub.s32 2, %v491
          %v493 = vrot.slane %v402, %v492
          %v494 = vadd.f32 %v487, %v493
          %v495 = vadd.f32 %v488, %v493
          %v496 = vadd.f32 %v489, %v493
          %v497 = vpack.c.bf16 %v495, %v494
          %v498 = vpack.c.bf16 %v496, %v496
          %v499 = vld [vmem:[%s3] sm:$0xf]
          %v500 = vld [vmem:[%s3 + $0x4] sm:$0xf]
          %v501 = vld [vmem:[%s3 + $0x8] sm:$0xf]
          %v502 = vld [vmem:[%s3 + $0xc] sm:$0xf]
          %v503 = vld [vmem:[%s3 + $0x10] sm:$0xf]
          %v504 = vld [vmem:[%s3 + $0x14] sm:$0xf]
          %v505 = vld [vmem:[%s3 + $0x18] sm:$0xf]
          %v506 = vld [vmem:[%s3 + $0x1c] sm:$0xf]
          %v507 = vld [vmem:[%s3 + $0x20] sm:$0xf]
          %v508 = vld [vmem:[%s3 + $0x24] sm:$0xf]
          %v509 = vld [vmem:[%s3 + $0x28] sm:$0xf]
          %v510 = vld [vmem:[%s3 + $0x2c] sm:$0xf]
          %v511 = vld [vmem:[%s3 + $0x30] sm:$0xf]
          %v512 = vld [vmem:[%s3 + $0x34] sm:$0xf]
          %v513 = vld [vmem:[%s3 + $0x38] sm:$0xf]
          %v514 = vld [vmem:[%s3 + $0x3c] sm:$0xf]
          %v515 = vlaneseq
          %v516 = vshrl.u32 %v515, 7
          %v517 = vsub.s32 3, %v516
          %v518 = vrot.slane %v402, %v517
          %v535 = vunpack.c.l.b16 %v499
          %v536 = vunpack.c.l.b16 %v500
          %v537 = vunpack.c.l.b16 %v501
          %v538 = vunpack.c.l.b16 %v502
          %v539 = vunpack.c.l.b16 %v503
          %v540 = vunpack.c.l.b16 %v504
          %v541 = vunpack.c.l.b16 %v505
          %v542 = vunpack.c.l.b16 %v506
          %v543 = vunpack.c.l.b16 %v507
          %v544 = vunpack.c.l.b16 %v508
          %v545 = vunpack.c.l.b16 %v509
          %v546 = vunpack.c.l.b16 %v510
          %v547 = vunpack.c.l.b16 %v511
          %v548 = vunpack.c.l.b16 %v512
          %v549 = vunpack.c.l.b16 %v513
          %v550 = vunpack.c.l.b16 %v514
          %v551 = vpack.c.b16 %v536, %v535
          %v552 = vpack.c.b16 %v538, %v537
          %v553 = vpack.c.b16 %v540, %v539
          %v554 = vpack.c.b16 %v542, %v541
          %v555 = vpack.c.b16 %v544, %v543
          %v556 = vpack.c.b16 %v546, %v545
          %v557 = vpack.c.b16 %v548, %v547
          %v558 = vpack.c.b16 %v550, %v549
          %567 = vmatprep.subr.bf16.mxu0 0
          %568 = vmatpush1.bf16.msra.mxu0 %v558
          %569 = vmatprep.subr.bf16.mxu0 0
          %570 = vmatpush1.bf16.msra.mxu0 %v557
          %571 = vmatprep.subr.bf16.mxu0 0
          %572 = vmatpush1.bf16.msra.mxu0 %v556
          %573 = vmatprep.subr.bf16.mxu0 0
          %574 = vmatpush1.bf16.msra.mxu0 %v555
          %575 = vmatprep.subr.bf16.mxu0 0
          %576 = vmatpush1.bf16.msra.mxu0 %v554
          %577 = vmatprep.subr.bf16.mxu0 0
          %578 = vmatpush1.bf16.msra.mxu0 %v553
          %579 = vmatprep.subr.bf16.mxu0 0
          %580 = vmatpush1.bf16.msra.mxu0 %v552
          %581 = vmatprep.subr.bf16.mxu0 0
          %582 = vmatpush1.bf16.msra.mxu0 %v551
          %583 = vmatprep.subr.bf16.mxu0 0
          %584 = vmatpush2.bf16.msra.mxu0 0
          %585 = vmatprep.subr.bf16.mxu0 0
          %586 = vmatpush2.bf16.msra.mxu0 0
          %587 = vmatprep.subr.bf16.mxu0 0
          %588 = vmatpush2.bf16.msra.mxu0 0
          %589 = vmatprep.subr.bf16.mxu0 0
          %590 = vmatpush2.bf16.msra.mxu0 0
          %591 = vmatprep.subr.bf16.mxu0 0
          %592 = vmatpush2.bf16.msra.mxu0 0
          %593 = vmatprep.subr.bf16.mxu0 0
          %594 = vmatpush2.bf16.msra.mxu0 0
          %595 = vmatprep.subr.bf16.mxu0 0
          %596 = vmatpush2.bf16.msra.mxu0 0
          %597 = vmatprep.subr.bf16.mxu0 0
          %598 = vmatpush2.bf16.msra.mxu0 0
          %599 = vmatprep.mubr.bf16.mxu0 0
          %600 = vmatmul.mubr.bf16.gmra.mxu0 %v497
          %v601 = vpop.f32.mrf.mxu0
          %v602 = vadd.f32 %v518, %v601
          %v603 = vpop.f32.mrf.mxu0
          %v604 = vpop.f32.mrf.mxu0
          %v605 = vadd.f32 %v518, %v604
          %v606 = vpop.f32.mrf.mxu0
          %607 = vmatprep.mubr.bf16.mxu0 0
          %608 = vmatmul.mubr.bf16.gmra.mxu0 %v498
          %v609 = vpop.f32.mrf.mxu0
          %v610 = vadd.f32 %v518, %v609
          %v611 = vpop.f32.mrf.mxu0
          %v612 = vpop.f32.mrf.mxu0
          %v613 = vpop.f32.mrf.mxu0
          %614 = vdwg.mxu0
          %v615 = vsub.f32 %v602, %v605
          %v616 = vand.u32 2147483647, %v615
          %617 = vmax.xlane.f32.xlu0 %v616
          %v618 = vpop.xlane.xlu0 %617
          %v620 = vlaneseq
          %v621 = vand.u32 %v620, 127
          %v622 = vlaneseq
          %v623 = vshrl.u32 %v622, 7
          %v624 = vsub.s32 %v621, %v623
          %v625 = vrot.slane %v618, %v624
          %vm627 = vcmask 57344
          %628 = vst.msk [vmem:[%s4] sm:$0x1] %vm627, %v625
          %v629 = vsub.f32 %v602, %v610
          %v630 = vand.u32 2147483647, %v629
          %631 = vmax.xlane.f32.xlu0 %v630
          %v632 = vpop.xlane.xlu0 %631
          %v634 = vlaneseq
          %v635 = vshrl.u32 %v634, 7
          %v636 = vsub.s32 %v621, %v635
          %v637 = vrot.slane %v632, %v636
          %639 = vst.msk [vmem:[%s4 + $0x1] sm:$0x1] %vm627, %v637
        $region85: #{siamase_forward.1} parent=72 // pred_fallthru
          _
        // Predicated region
        $region86: #{siamase_forward.1} parent=72 // pred_check
          %p640 = pneg %p122
        $region87: #{siamase_forward.1} parent=72 // pred_check_branch
          %642 = sbr.rel (%p640) target = $region89
        $region88: #{siamase_forward.1} parent=72 // pred_region
          _
        $region89: #{siamase_forward.1} parent=72 // pred_fallthru
          _
        // Predicated region
        $region90: #{siamase_forward.1} parent=72 // pred_check
          %p643 = pneg %p122
        $region91: #{siamase_forward.1} parent=72 // pred_check_branch
          %645 = sbr.rel (%p643) target = $region93
        $region92: #{siamase_forward.1} parent=72 // pred_region
          _
        $region93: #{siamase_forward.1} parent=72 // pred_fallthru
          _
      $region73: #{siamase_forward.1} parent=5 // pred_fallthru
        _
      %p646 = scmp.le.s32.totalorder 2, %s10
      // Predicated region
      $region94: #{siamase_forward.1} parent=5 // pred_check
        %p647 = pneg %p646
      $region95: #{siamase_forward.1} parent=5 // pred_check_branch
        %649 = sbr.rel (%p647) target = $region97
      $region96: #{siamase_forward.1} parent=5 // pred_region
        %s650 = ssub.s32 %s10, 2
      $region97: #{siamase_forward.1} parent=5 // pred_fallthru
        _
    $region6: #{siamase_forward.1} parent=1 // loop_footer
      %s14 = sadd.s32 1, %s10
    $region7: #{siamase_forward.1} parent=1 // loop_footer_branch
      %9 = sbr.rel target = $region3
    $region8: #{siamase_forward.1} parent=1 // loop_exit
      _

</llo_original>
